<compile_context>
chip_gen: v7x
topology: tpu7x:2x2x1
jax: 0.10.0
libtpu: 0.0.40
codegen_flags: <defaults>
</compile_context>

<pallas_src>
import jax
import jax.numpy as jnp
from jax import lax
from jax.experimental import pallas as pl
from jax.experimental.pallas import tpu as pltpu  # noqa: F401  (TPU backend)

# ---- small, TPU-friendly shapes consistent with the module's forward ----
B = 8            # batch size (must be even; positive_border = B // 2)
S = 16           # sequence length (only the CLS column is used for 'cls' pooling)
H = 128          # hidden size
V = 64           # vocab size of the synthetic embedding table
P = B // 2       # positive_border

assert 1 + P <= 8, "score rows must fit in the (8, 128) output tile"


# --------------------------------------------------------------------------
# Fused kernel: CLS embedding gather + encoder projections + relevance head
# --------------------------------------------------------------------------
def _fused_kernel(q_ids_ref, d_ids_ref, q_tbl_ref, d_tbl_ref,
                  q_w_ref, q_b_ref, d_w_ref, d_b_ref, out_ref):
    n = 2 * B  # qr/ql (or dr/dl) CLS rows stacked along M

    # ---- embedding gather, done in-VMEM as a one-hot MXU matmul -----------
    vocab = lax.broadcasted_iota(jnp.int32, (n, V), 1)
    q_onehot = (q_ids_ref[...] == vocab).astype(jnp.float32)     # [2B, V]
    d_onehot = (d_ids_ref[...] == vocab).astype(jnp.float32)     # [2B, V]
    q_cls = jnp.dot(q_onehot, q_tbl_ref[...],
                    preferred_element_type=jnp.float32)          # [2B, H]
    d_cls = jnp.dot(d_onehot, d_tbl_ref[...],
                    preferred_element_type=jnp.float32)          # [2B, H]

    # ---- stacked encoder projections: tanh(x @ W + b) ---------------------
    # bf16 matmul operands (weights arrive pre-cast), f32 accumulation.
    q_h = jnp.tanh(
        jnp.dot(q_cls.astype(jnp.bfloat16), q_w_ref[...],
                preferred_element_type=jnp.float32) + q_b_ref[...])  # [2B, H]
    d_h = jnp.tanh(
        jnp.dot(d_cls.astype(jnp.bfloat16), d_w_ref[...],
                preferred_element_type=jnp.float32) + d_b_ref[...])  # [2B, H]

    qr = q_h[:B]   # rich-language query embeddings  [B, H]
    ql = q_h[B:]   # low-language  query embeddings  [B, H]
    dr = d_h[:B]   # rich-language doc embeddings    [B, H]
    dl = d_h[B:]   # low-language  doc embeddings    [B, H]

    rich = qr * dr                                   # rich_lang_rel_embeddings
    low = ql * dl                                    # low_lang_rel_embeddings

    # ---- cosine matrices [P, B]: contract last axes, no explicit .T -------
    dn = (((1,), (1,)), ((), ()))
    lang_rel = lax.dot_general(rich[:P], low, dn,
                               preferred_element_type=jnp.float32)
    rank_rich = lax.dot_general(qr[:P], dr, dn,
                                preferred_element_type=jnp.float32)
    rank_low = lax.dot_general(ql[:P], dl, dn,
                               preferred_element_type=jnp.float32)

    # ---- diagonals computed mask-free: diag(a[:P] @ b.T) = sum(a*b, -1) ---
    diag_rel = jnp.sum(rich[:P] * low[:P], axis=-1, keepdims=True)   # [P, 1]
    diag_rich = jnp.sum(qr[:P] * dr[:P], axis=-1, keepdims=True)     # [P, 1]
    diag_low = jnp.sum(ql[:P] * dl[:P], axis=-1, keepdims=True)      # [P, 1]

    def lse(s):  # logsumexp along lanes: [P, B] -> [P, 1]
        m = jnp.max(s, axis=-1, keepdims=True)
        return m + jnp.log(jnp.sum(jnp.exp(s - m), axis=-1, keepdims=True))

    lse_rel = lse(lang_rel)
    lse_rich = lse(rank_rich)
    lse_low = lse(rank_low)

    # InBatchNegativeCELoss(s) = mean_i( logsumexp(s_i) - s[i, i] )
    loss_rel_xfer = jnp.mean(lse_rel - diag_rel)
    loss_rank_rich = jnp.mean(lse_rich - diag_rich)
    loss_rank_low = jnp.mean(lse_low - diag_low)

    # InBatchKLLoss(rank_low, rank_rich), reduction='batchmean':
    #   sum(softmax(rich) * (log_softmax(rich) - log_softmax(low))) / P
    log_p_rich = rank_rich - lse_rich
    log_p_low = rank_low - lse_low
    p_rich = jnp.exp(log_p_rich)
    loss_rank_xfer = jnp.sum(p_rich * (log_p_rich - log_p_low)) / P

    loss_rank = loss_rank_rich + loss_rank_low
    loss_xfer = loss_rel_xfer + loss_rank_xfer
    total_loss = loss_rank + loss_xfer

    # ---- single lane-dense (8, 128) output tile ---------------------------
    out_ref[0:1, :] = jnp.broadcast_to(total_loss, (1, 128))
    out_ref[1:1 + P, :] = jnp.broadcast_to(diag_rich, (P, 128))
    out_ref[1 + P:, :] = jnp.zeros((8 - 1 - P, 128), jnp.float32)


def _relevance_transfer_call(q_ids, d_ids, q_tbl, d_tbl, q_w, q_b, d_w, d_b):
    return pl.pallas_call(
        _fused_kernel,
        out_shape=jax.ShapeDtypeStruct((8, 128), jnp.float32),
        in_specs=[
            pl.BlockSpec((2 * B, 1), lambda: (0, 0)),   # query CLS ids
            pl.BlockSpec((2 * B, 1), lambda: (0, 0)),   # doc   CLS ids
            pl.BlockSpec((V, H), lambda: (0, 0)),       # query emb table
            pl.BlockSpec((V, H), lambda: (0, 0)),       # doc   emb table
            pl.BlockSpec((H, H), lambda: (0, 0)),       # query proj W (bf16)
            pl.BlockSpec((1, H), lambda: (0, 0)),       # query proj b
            pl.BlockSpec((H, H), lambda: (0, 0)),       # doc   proj W (bf16)
            pl.BlockSpec((1, H), lambda: (0, 0)),       # doc   proj b
        ],
        out_specs=pl.BlockSpec((8, 128), lambda: (0, 0)),
    )(q_ids, d_ids, q_tbl, d_tbl, q_w, q_b, d_w, d_b)


# --------------------------------------------------------------------------
# Module wrapper (thin JAX glue around the single fused Pallas kernel)
# --------------------------------------------------------------------------
def bi_encoder_relevance_transfer_forward(params, qr_inputs, dr_inputs,
                                          ql_inputs, dl_inputs, labels=None,
                                          keep_d_dims=True, pooling="cls"):
    del labels, keep_d_dims  # unused by the reference forward
    if pooling == "mean":
        # TODO(synk): mean-pooling branch (module default is 'cls'); not exercised here.
        raise NotImplementedError

    # 'cls' pooling only ever reads token 0 of each sequence, so only the CLS
    # ids are shipped to the kernel; attention masks are unused on this path.
    q_ids = jnp.concatenate(
        [qr_inputs["input_ids"][:, 0], ql_inputs["input_ids"][:, 0]]
    ).astype(jnp.int32).reshape(2 * B, 1)
    d_ids = jnp.concatenate(
        [dr_inputs["input_ids"][:, 0], dl_inputs["input_ids"][:, 0]]
    ).astype(jnp.int32).reshape(2 * B, 1)

    out_tile = _relevance_transfer_call(
        q_ids, d_ids,
        params["query_emb"], params["doc_emb"],
        params["query_w"].astype(jnp.bfloat16), params["query_b"],
        params["doc_w"].astype(jnp.bfloat16), params["doc_b"])

    loss = out_tile[0, 0]
    score = out_tile[1:1 + P, 0]
    return {"loss": loss, "score": score}


def init_params(key):
    k1, k2, k3, k4, k5, k6 = jax.random.split(key, 6)
    scale = 0.02
    return {
        "query_emb": scale * jax.random.normal(k1, (V, H), jnp.float32),
        "query_w": scale * jax.random.normal(k2, (H, H), jnp.float32),
        "query_b": scale * jax.random.normal(k3, (1, H), jnp.float32),
        "doc_emb": scale * jax.random.normal(k4, (V, H), jnp.float32),
        "doc_w": scale * jax.random.normal(k5, (H, H), jnp.float32),
        "doc_b": scale * jax.random.normal(k6, (1, H), jnp.float32),
    }


if __name__ == "__main__":
    root = jax.random.PRNGKey(0)
    k_params, k_qr, k_dr, k_ql, k_dl = jax.random.split(root, 5)
    params = init_params(k_params)

    def make_inputs(k):
        ids = jax.random.randint(k, (B, S), 0, V, dtype=jnp.int32)
        mask = jnp.ones((B, S), dtype=jnp.int32)
        return {"input_ids": ids, "attention_mask": mask}

    qr_inputs = make_inputs(k_qr)
    dr_inputs = make_inputs(k_dr)
    ql_inputs = make_inputs(k_ql)
    dl_inputs = make_inputs(k_dl)

    out = bi_encoder_relevance_transfer_forward(params, qr_inputs, dr_inputs,
                                                ql_inputs, dl_inputs)
    jax.block_until_ready(out["loss"])
    jax.block_until_ready(out["score"])
    assert out["loss"].shape == ()
    assert out["score"].shape == (P,)
    assert bool(jnp.isfinite(out["loss"]))
    assert bool(jnp.all(jnp.isfinite(out["score"])))
    print("KERNEL_OK")
</pallas_src>

<mosaic_0001>
module attributes {stable_mosaic.version = 11 : i64} {
  func.func @_fused_kernel(%arg0: memref<16x1xi32, #tpu.memory_space<vmem>>, %arg1: memref<16x1xi32, #tpu.memory_space<vmem>>, %arg2: memref<64x128xf32, #tpu.memory_space<vmem>>, %arg3: memref<64x128xf32, #tpu.memory_space<vmem>>, %arg4: memref<128x128xbf16, #tpu.memory_space<vmem>>, %arg5: memref<1x128xf32, #tpu.memory_space<vmem>>, %arg6: memref<128x128xbf16, #tpu.memory_space<vmem>>, %arg7: memref<1x128xf32, #tpu.memory_space<vmem>>, %arg8: memref<8x128xf32, #tpu.memory_space<vmem>>) attributes {dimension_semantics = [], scalar_prefetch = 0 : i64, scratch_operands = 0 : i64, tpu.core_type = #tpu.core_type<tc>} {
    %0 = tpu.iota {dimensions = array<i32: 1>} : vector<16x64xi32>
    %c0 = arith.constant 0 : index
    %c0_0 = arith.constant 0 : index
    %1 = vector.load %arg0[%c0, %c0_0] : memref<16x1xi32, #tpu.memory_space<vmem>>, vector<16x1xi32>
    %2 = vector.broadcast %1 : vector<16x1xi32> to vector<16x64xi32>
    %3 = arith.cmpi eq, %2, %0 : vector<16x64xi32>
    %4 = arith.extui %3 : vector<16x64xi1> to vector<16x64xi32>
    %5 = arith.sitofp %4 : vector<16x64xi32> to vector<16x64xf32>
    %c0_1 = arith.constant 0 : index
    %c0_2 = arith.constant 0 : index
    %6 = vector.load %arg1[%c0_1, %c0_2] : memref<16x1xi32, #tpu.memory_space<vmem>>, vector<16x1xi32>
    %7 = vector.broadcast %6 : vector<16x1xi32> to vector<16x64xi32>
    %8 = arith.cmpi eq, %7, %0 : vector<16x64xi32>
    %9 = arith.extui %8 : vector<16x64xi1> to vector<16x64xi32>
    %10 = arith.sitofp %9 : vector<16x64xi32> to vector<16x64xf32>
    %c0_3 = arith.constant 0 : index
    %c0_4 = arith.constant 0 : index
    %11 = vector.load %arg2[%c0_3, %c0_4] : memref<64x128xf32, #tpu.memory_space<vmem>>, vector<64x128xf32>
    %cst = arith.constant dense<0.000000e+00> : vector<16x128xf32>
    %12 = tpu.matmul %5, %11, %cst {dimension_numbers = #tpu.dot_dimension_numbers<[1], [0], [0], [1], [0, 0, 1, 1], [], []>} : vector<16x64xf32>, vector<64x128xf32>, vector<16x128xf32> -> vector<16x128xf32>
    %c0_5 = arith.constant 0 : index
    %c0_6 = arith.constant 0 : index
    %13 = vector.load %arg3[%c0_5, %c0_6] : memref<64x128xf32, #tpu.memory_space<vmem>>, vector<64x128xf32>
    %cst_7 = arith.constant dense<0.000000e+00> : vector<16x128xf32>
    %14 = tpu.matmul %10, %13, %cst_7 {dimension_numbers = #tpu.dot_dimension_numbers<[1], [0], [0], [1], [0, 0, 1, 1], [], []>} : vector<16x64xf32>, vector<64x128xf32>, vector<16x128xf32> -> vector<16x128xf32>
    %15 = arith.truncf %12 : vector<16x128xf32> to vector<16x128xbf16>
    %c0_8 = arith.constant 0 : index
    %c0_9 = arith.constant 0 : index
    %16 = vector.load %arg4[%c0_8, %c0_9] : memref<128x128xbf16, #tpu.memory_space<vmem>>, vector<128x128xbf16>
    %cst_10 = arith.constant dense<0.000000e+00> : vector<16x128xf32>
    %17 = tpu.matmul %15, %16, %cst_10 {dimension_numbers = #tpu.dot_dimension_numbers<[1], [0], [0], [1], [0, 0, 1, 1], [], []>} : vector<16x128xbf16>, vector<128x128xbf16>, vector<16x128xf32> -> vector<16x128xf32>
    %c0_11 = arith.constant 0 : index
    %c0_12 = arith.constant 0 : index
    %18 = vector.load %arg5[%c0_11, %c0_12] : memref<1x128xf32, #tpu.memory_space<vmem>>, vector<1x128xf32>
    %19 = vector.broadcast %18 : vector<1x128xf32> to vector<16x128xf32>
    %20 = arith.addf %17, %19 : vector<16x128xf32>
    %21 = math.tanh %20 : vector<16x128xf32>
    %22 = arith.truncf %14 : vector<16x128xf32> to vector<16x128xbf16>
    %c0_13 = arith.constant 0 : index
    %c0_14 = arith.constant 0 : index
    %23 = vector.load %arg6[%c0_13, %c0_14] : memref<128x128xbf16, #tpu.memory_space<vmem>>, vector<128x128xbf16>
    %cst_15 = arith.constant dense<0.000000e+00> : vector<16x128xf32>
    %24 = tpu.matmul %22, %23, %cst_15 {dimension_numbers = #tpu.dot_dimension_numbers<[1], [0], [0], [1], [0, 0, 1, 1], [], []>} : vector<16x128xbf16>, vector<128x128xbf16>, vector<16x128xf32> -> vector<16x128xf32>
    %c0_16 = arith.constant 0 : index
    %c0_17 = arith.constant 0 : index
    %25 = vector.load %arg7[%c0_16, %c0_17] : memref<1x128xf32, #tpu.memory_space<vmem>>, vector<1x128xf32>
    %26 = vector.broadcast %25 : vector<1x128xf32> to vector<16x128xf32>
    %27 = arith.addf %24, %26 : vector<16x128xf32>
    %28 = math.tanh %27 : vector<16x128xf32>
    %29 = vector.extract_strided_slice %21 {offsets = [0, 0], sizes = [8, 128], strides = [1, 1]} : vector<16x128xf32> to vector<8x128xf32>
    %30 = vector.extract_strided_slice %21 {offsets = [8, 0], sizes = [8, 128], strides = [1, 1]} : vector<16x128xf32> to vector<8x128xf32>
    %31 = vector.extract_strided_slice %28 {offsets = [0, 0], sizes = [8, 128], strides = [1, 1]} : vector<16x128xf32> to vector<8x128xf32>
    %32 = vector.extract_strided_slice %28 {offsets = [8, 0], sizes = [8, 128], strides = [1, 1]} : vector<16x128xf32> to vector<8x128xf32>
    %33 = arith.mulf %29, %31 : vector<8x128xf32>
    %34 = arith.mulf %30, %32 : vector<8x128xf32>
    %35 = vector.extract_strided_slice %33 {offsets = [0, 0], sizes = [4, 128], strides = [1, 1]} : vector<8x128xf32> to vector<4x128xf32>
    %cst_18 = arith.constant dense<0.000000e+00> : vector<4x8xf32>
    %36 = tpu.matmul %35, %34, %cst_18 {dimension_numbers = #tpu.dot_dimension_numbers<[1], [1], [0], [0], [0, 0, 1, 0], [], []>} : vector<4x128xf32>, vector<8x128xf32>, vector<4x8xf32> -> vector<4x8xf32>
    %37 = vector.extract_strided_slice %29 {offsets = [0, 0], sizes = [4, 128], strides = [1, 1]} : vector<8x128xf32> to vector<4x128xf32>
    %cst_19 = arith.constant dense<0.000000e+00> : vector<4x8xf32>
    %38 = tpu.matmul %37, %31, %cst_19 {dimension_numbers = #tpu.dot_dimension_numbers<[1], [1], [0], [0], [0, 0, 1, 0], [], []>} : vector<4x128xf32>, vector<8x128xf32>, vector<4x8xf32> -> vector<4x8xf32>
    %39 = vector.extract_strided_slice %30 {offsets = [0, 0], sizes = [4, 128], strides = [1, 1]} : vector<8x128xf32> to vector<4x128xf32>
    %cst_20 = arith.constant dense<0.000000e+00> : vector<4x8xf32>
    %40 = tpu.matmul %39, %32, %cst_20 {dimension_numbers = #tpu.dot_dimension_numbers<[1], [1], [0], [0], [0, 0, 1, 0], [], []>} : vector<4x128xf32>, vector<8x128xf32>, vector<4x8xf32> -> vector<4x8xf32>
    %41 = vector.extract_strided_slice %33 {offsets = [0, 0], sizes = [4, 128], strides = [1, 1]} : vector<8x128xf32> to vector<4x128xf32>
    %42 = vector.extract_strided_slice %34 {offsets = [0, 0], sizes = [4, 128], strides = [1, 1]} : vector<8x128xf32> to vector<4x128xf32>
    %43 = arith.mulf %41, %42 : vector<4x128xf32>
    %cst_21 = arith.constant dense<0.000000e+00> : vector<4xf32>
    %44 = vector.multi_reduction <add>, %43, %cst_21 [1] : vector<4x128xf32> to vector<4xf32>
    %45 = vector.shape_cast %44 : vector<4xf32> to vector<4x1xf32>
    %46 = vector.extract_strided_slice %29 {offsets = [0, 0], sizes = [4, 128], strides = [1, 1]} : vector<8x128xf32> to vector<4x128xf32>
    %47 = vector.extract_strided_slice %31 {offsets = [0, 0], sizes = [4, 128], strides = [1, 1]} : vector<8x128xf32> to vector<4x128xf32>
    %48 = arith.mulf %46, %47 : vector<4x128xf32>
    %cst_22 = arith.constant dense<0.000000e+00> : vector<4xf32>
    %49 = vector.multi_reduction <add>, %48, %cst_22 [1] : vector<4x128xf32> to vector<4xf32>
    %50 = vector.shape_cast %49 : vector<4xf32> to vector<4x1xf32>
    %51 = vector.extract_strided_slice %30 {offsets = [0, 0], sizes = [4, 128], strides = [1, 1]} : vector<8x128xf32> to vector<4x128xf32>
    %52 = vector.extract_strided_slice %32 {offsets = [0, 0], sizes = [4, 128], strides = [1, 1]} : vector<8x128xf32> to vector<4x128xf32>
    %53 = arith.mulf %51, %52 : vector<4x128xf32>
    %cst_23 = arith.constant dense<0.000000e+00> : vector<4xf32>
    %54 = vector.multi_reduction <add>, %53, %cst_23 [1] : vector<4x128xf32> to vector<4xf32>
    %55 = vector.shape_cast %54 : vector<4xf32> to vector<4x1xf32>
    %cst_24 = arith.constant dense<0xFF800000> : vector<4xf32>
    %56 = vector.multi_reduction <maximumf>, %36, %cst_24 [1] : vector<4x8xf32> to vector<4xf32>
    %57 = vector.shape_cast %56 : vector<4xf32> to vector<4x1xf32>
    %58 = vector.broadcast %57 : vector<4x1xf32> to vector<4x8xf32>
    %59 = arith.subf %36, %58 : vector<4x8xf32>
    %60 = math.exp %59 : vector<4x8xf32>
    %cst_25 = arith.constant dense<0.000000e+00> : vector<4xf32>
    %61 = vector.multi_reduction <add>, %60, %cst_25 [1] : vector<4x8xf32> to vector<4xf32>
    %62 = vector.shape_cast %61 : vector<4xf32> to vector<4x1xf32>
    %63 = math.log %62 : vector<4x1xf32>
    %64 = arith.addf %57, %63 : vector<4x1xf32>
    %cst_26 = arith.constant dense<0xFF800000> : vector<4xf32>
    %65 = vector.multi_reduction <maximumf>, %38, %cst_26 [1] : vector<4x8xf32> to vector<4xf32>
    %66 = vector.shape_cast %65 : vector<4xf32> to vector<4x1xf32>
    %67 = vector.broadcast %66 : vector<4x1xf32> to vector<4x8xf32>
    %68 = arith.subf %38, %67 : vector<4x8xf32>
    %69 = math.exp %68 : vector<4x8xf32>
    %cst_27 = arith.constant dense<0.000000e+00> : vector<4xf32>
    %70 = vector.multi_reduction <add>, %69, %cst_27 [1] : vector<4x8xf32> to vector<4xf32>
    %71 = vector.shape_cast %70 : vector<4xf32> to vector<4x1xf32>
    %72 = math.log %71 : vector<4x1xf32>
    %73 = arith.addf %66, %72 : vector<4x1xf32>
    %cst_28 = arith.constant dense<0xFF800000> : vector<4xf32>
    %74 = vector.multi_reduction <maximumf>, %40, %cst_28 [1] : vector<4x8xf32> to vector<4xf32>
    %75 = vector.shape_cast %74 : vector<4xf32> to vector<4x1xf32>
    %76 = vector.broadcast %75 : vector<4x1xf32> to vector<4x8xf32>
    %77 = arith.subf %40, %76 : vector<4x8xf32>
    %78 = math.exp %77 : vector<4x8xf32>
    %cst_29 = arith.constant dense<0.000000e+00> : vector<4xf32>
    %79 = vector.multi_reduction <add>, %78, %cst_29 [1] : vector<4x8xf32> to vector<4xf32>
    %80 = vector.shape_cast %79 : vector<4xf32> to vector<4x1xf32>
    %81 = math.log %80 : vector<4x1xf32>
    %82 = arith.addf %75, %81 : vector<4x1xf32>
    %83 = arith.subf %64, %45 : vector<4x1xf32>
    %84 = vector.shape_cast %83 : vector<4x1xf32> to vector<1x4x1xf32>
    %cst_30 = arith.constant dense<0.000000e+00> : vector<1xf32>
    %85 = vector.multi_reduction <add>, %84, %cst_30 [1, 2] : vector<1x4x1xf32> to vector<1xf32>
    %86 = vector.shape_cast %85 : vector<1xf32> to vector<1x1x1xf32>
    %87 = vector.extract %86[0, 0, 0] : f32 from vector<1x1x1xf32>
    %cst_31 = arith.constant 4.000000e+00 : f32
    %88 = arith.divf %87, %cst_31 : f32
    %89 = arith.subf %73, %50 : vector<4x1xf32>
    %90 = vector.shape_cast %89 : vector<4x1xf32> to vector<1x4x1xf32>
    %cst_32 = arith.constant dense<0.000000e+00> : vector<1xf32>
    %91 = vector.multi_reduction <add>, %90, %cst_32 [1, 2] : vector<1x4x1xf32> to vector<1xf32>
    %92 = vector.shape_cast %91 : vector<1xf32> to vector<1x1x1xf32>
    %93 = vector.extract %92[0, 0, 0] : f32 from vector<1x1x1xf32>
    %cst_33 = arith.constant 4.000000e+00 : f32
    %94 = arith.divf %93, %cst_33 : f32
    %95 = arith.subf %82, %55 : vector<4x1xf32>
    %96 = vector.shape_cast %95 : vector<4x1xf32> to vector<1x4x1xf32>
    %cst_34 = arith.constant dense<0.000000e+00> : vector<1xf32>
    %97 = vector.multi_reduction <add>, %96, %cst_34 [1, 2] : vector<1x4x1xf32> to vector<1xf32>
    %98 = vector.shape_cast %97 : vector<1xf32> to vector<1x1x1xf32>
    %99 = vector.extract %98[0, 0, 0] : f32 from vector<1x1x1xf32>
    %cst_35 = arith.constant 4.000000e+00 : f32
    %100 = arith.divf %99, %cst_35 : f32
    %101 = vector.broadcast %73 : vector<4x1xf32> to vector<4x8xf32>
    %102 = arith.subf %38, %101 : vector<4x8xf32>
    %103 = vector.broadcast %82 : vector<4x1xf32> to vector<4x8xf32>
    %104 = arith.subf %40, %103 : vector<4x8xf32>
    %105 = math.exp %102 : vector<4x8xf32>
    %106 = arith.subf %102, %104 : vector<4x8xf32>
    %107 = arith.mulf %105, %106 : vector<4x8xf32>
    %108 = vector.shape_cast %107 : vector<4x8xf32> to vector<1x4x8xf32>
    %cst_36 = arith.constant dense<0.000000e+00> : vector<1xf32>
    %109 = vector.multi_reduction <add>, %108, %cst_36 [1, 2] : vector<1x4x8xf32> to vector<1xf32>
    %110 = vector.shape_cast %109 : vector<1xf32> to vector<1x1x1xf32>
    %111 = vector.extract %110[0, 0, 0] : f32 from vector<1x1x1xf32>
    %cst_37 = arith.constant 4.000000e+00 : f32
    %112 = arith.divf %111, %cst_37 : f32
    %113 = arith.addf %94, %100 : f32
    %114 = arith.addf %88, %112 : f32
    %115 = arith.addf %113, %114 : f32
    %116 = vector.broadcast %115 : f32 to vector<1x128xf32>
    %c0_38 = arith.constant 0 : index
    %c0_39 = arith.constant 0 : index
    %117 = vector.load %arg8[%c0_38, %c0_39] : memref<8x128xf32, #tpu.memory_space<vmem>>, vector<1x128xf32>
    tpu.vector_store %arg8[%c0_38, %c0_39], %116 {strides = array<i32>} : memref<8x128xf32, #tpu.memory_space<vmem>>, vector<1x128xf32>,
    %118 = vector.shape_cast %50 : vector<4x1xf32> to vector<4x1xf32>
    %119 = vector.broadcast %118 : vector<4x1xf32> to vector<4x128xf32>
    %c1 = arith.constant 1 : index
    %c0_40 = arith.constant 0 : index
    %120 = vector.load %arg8[%c1, %c0_40] : memref<8x128xf32, #tpu.memory_space<vmem>>, vector<4x128xf32>
    tpu.vector_store %arg8[%c1, %c0_40], %119 {strides = array<i32>} : memref<8x128xf32, #tpu.memory_space<vmem>>, vector<4x128xf32>,
    %cst_41 = arith.constant 0.000000e+00 : f32
    %121 = vector.broadcast %cst_41 : f32 to vector<3x128xf32>
    %c5 = arith.constant 5 : index
    %c0_42 = arith.constant 0 : index
    %122 = vector.load %arg8[%c5, %c0_42] : memref<8x128xf32, #tpu.memory_space<vmem>>, vector<3x128xf32>
    tpu.vector_store %arg8[%c5, %c0_42], %121 {strides = array<i32>} : memref<8x128xf32, #tpu.memory_space<vmem>>, vector<3x128xf32>,
    return
  }
}

</mosaic_0001>

<llo_original>
// kernel: tpu_custom_call.1
$region0: #{tpu_custom_call.1}
  #allocation0 [shape = 'u32[]', space=smem, size = 0x4, offset = 0x4, fixed_abs, tag = 'smem constant byte address 0x4 - core index']
  #allocation1 [shape = 'u32[144,128]{1,0:T(1,128)}', space=vmem, size = 0x12000, scoped, tag = 'internal scratch']
  %s0 = inlined_call_operand.vmem [shape: s32[16,1], index: 0, kind: input, shape index: {}]
  %s1 = inlined_call_operand.vmem [shape: s32[16,1], index: 1, kind: input, shape index: {}]
  %s2 = inlined_call_operand.hbm [shape: f32[64,128], index: 2, kind: input, shape index: {}]
  %s3 = inlined_call_operand.hbm [shape: f32[64,128], index: 3, kind: input, shape index: {}]
  %s4 = inlined_call_operand.hbm [shape: bf16[128,128], index: 4, kind: input, shape index: {}]
  %s5 = inlined_call_operand.vmem [shape: f32[1,128], index: 5, kind: input, shape index: {}]
  %s6 = inlined_call_operand.hbm [shape: bf16[128,128], index: 6, kind: input, shape index: {}]
  %s7 = inlined_call_operand.vmem [shape: f32[1,128], index: 7, kind: input, shape index: {}]
  %s8 = inlined_call_operand.hbm [shape: f32[8,128], index: 8, kind: output, shape index: {}]
  %s9 = sld [smem:[#allocation0]]
  $region58: #{tpu_custom_call.1} parent=0
    _
  %s11 = ssub.s32 1, %s9
  %s12 = scalar_select 0, %s11, %s9
  $region1: #{tpu_custom_call.1} parent=0
    #allocation2 [shape = 'u8[32768]{0}', space=vmem, size = 0x8000, scoped, tag = 'input window, operand 2, single buffered']
    #allocation3 [shape = 's32[1]{0}', space=sflag, size = 0x4, scoped, tag = 'scoped memory for tpu_custom_call.1']
    #allocation4 [shape = 's32[1]{0}', space=sflag, size = 0x4, scoped, tag = 'scoped memory for tpu_custom_call.1']
    #allocation5 [shape = 'u8[32768]{0}', space=vmem, size = 0x8000, scoped, tag = 'input window, operand 3, single buffered']
    #allocation6 [shape = 's32[1]{0}', space=sflag, size = 0x4, scoped, tag = 'scoped memory for tpu_custom_call.1']
    #allocation7 [shape = 'u8[32768]{0}', space=vmem, size = 0x8000, scoped, tag = 'input window, operand 4, single buffered']
    #allocation8 [shape = 'u8[32768]{0}', space=vmem, size = 0x8000, scoped, tag = 'input window, operand 6, single buffered']
    #allocation9 [shape = 's32[1]{0}', space=sflag, size = 0x4, scoped, tag = 'scoped memory for tpu_custom_call.1']
    #allocation10 [shape = 'u8[4096]{0}', space=vmem, size = 0x1000, scoped, tag = 'output window, operand 0, single buffered']
    %13 = vsyncpa [#allocation3], 0
    %14 = vsyncpa [#allocation6], 0
    %15 = vsyncpa [#allocation9], 0
    %16 = vsyncpa [#allocation4], 0
    // Predicated region
    $region2: #{tpu_custom_call.1} parent=1 // pred_check
      _
    $region3: #{tpu_custom_call.1} parent=1 // pred_check_branch
      %18 = sbr.rel (0) target = $region5
    $region4: #{tpu_custom_call.1} parent=1 // pred_region
      _
    $region5: #{tpu_custom_call.1} parent=1 // pred_fallthru
      _
    // Predicated region
    $region6: #{tpu_custom_call.1} parent=1 // pred_check
      _
    $region7: #{tpu_custom_call.1} parent=1 // pred_check_branch
      %20 = sbr.rel (0) target = $region9
    $region8: #{tpu_custom_call.1} parent=1 // pred_region
      _
    $region9: #{tpu_custom_call.1} parent=1 // pred_fallthru
      _
    // Predicated region
    $region10: #{tpu_custom_call.1} parent=1 // pred_check
      _
    $region11: #{tpu_custom_call.1} parent=1 // pred_check_branch
      %22 = sbr.rel (0) target = $region13
    $region12: #{tpu_custom_call.1} parent=1 // pred_region
      %s24 = ssub.s32 1024, 1024
      %25 = vsyncadd [#allocation3], %s24
      %s26 = sshll.u32 [#allocation2], 4
      %s27 = int_to_ptr.vmem [resolvable:$true] %s26
      %32 = dma.hbm_to_vmem [thread:$0]  %s2, 1024, %s27, [#allocation3], 128, 128, 8
    $region13: #{tpu_custom_call.1} parent=1 // pred_fallthru
      _
    // Predicated region
    $region14: #{tpu_custom_call.1} parent=1 // pred_check
      _
    $region15: #{tpu_custom_call.1} parent=1 // pred_check_branch
      %34 = sbr.rel (0) target = $region17
    $region16: #{tpu_custom_call.1} parent=1 // pred_region
      %s36 = ssub.s32 1024, 1024
      %37 = vsyncadd [#allocation6], %s36
      %s38 = sshll.u32 [#allocation5], 4
      %s39 = int_to_ptr.vmem [resolvable:$true] %s38
      %44 = dma.hbm_to_vmem [thread:$0]  %s3, 1024, %s39, [#allocation6], 128, 128, 8
    $region17: #{tpu_custom_call.1} parent=1 // pred_fallthru
      _
    // Predicated region
    $region18: #{tpu_custom_call.1} parent=1 // pred_check
      _
    $region19: #{tpu_custom_call.1} parent=1 // pred_check_branch
      %46 = sbr.rel (0) target = $region21
    $region20: #{tpu_custom_call.1} parent=1 // pred_region
      %s48 = ssub.s32 1024, 1024
      %49 = vsyncadd [#allocation6], %s48
      %s50 = sshll.u32 [#allocation7], 4
      %s51 = int_to_ptr.vmem [resolvable:$true] %s50
      %56 = dma.hbm_to_vmem [thread:$0]  %s4, 1024, %s51, [#allocation6], 64, 64, 4
    $region21: #{tpu_custom_call.1} parent=1 // pred_fallthru
      _
    // Predicated region
    $region22: #{tpu_custom_call.1} parent=1 // pred_check
      _
    $region23: #{tpu_custom_call.1} parent=1 // pred_check_branch
      %58 = sbr.rel (0) target = $region25
    $region24: #{tpu_custom_call.1} parent=1 // pred_region
      _
    $region25: #{tpu_custom_call.1} parent=1 // pred_fallthru
      _
    // Predicated region
    $region26: #{tpu_custom_call.1} parent=1 // pred_check
      _
    $region27: #{tpu_custom_call.1} parent=1 // pred_check_branch
      %60 = sbr.rel (0) target = $region29
    $region28: #{tpu_custom_call.1} parent=1 // pred_region
      %s62 = ssub.s32 1024, 1024
      %63 = vsyncadd [#allocation9], %s62
      %s64 = sshll.u32 [#allocation8], 4
      %s65 = int_to_ptr.vmem [resolvable:$true] %s64
      %70 = dma.hbm_to_vmem [thread:$0]  %s6, 1024, %s65, [#allocation9], 64, 64, 4
    $region29: #{tpu_custom_call.1} parent=1 // pred_fallthru
      _
    // Predicated region
    $region30: #{tpu_custom_call.1} parent=1 // pred_check
      _
    $region31: #{tpu_custom_call.1} parent=1 // pred_check_branch
      %72 = sbr.rel (0) target = $region33
    $region32: #{tpu_custom_call.1} parent=1 // pred_region
      _
    $region33: #{tpu_custom_call.1} parent=1 // pred_fallthru
      _
    // Predicated region
    $region34: #{tpu_custom_call.1} parent=1 // pred_check
      _
    $region35: #{tpu_custom_call.1} parent=1 // pred_check_branch
      %74 = sbr.rel (0) target = $region37
    $region36: #{tpu_custom_call.1} parent=1 // pred_region
      %75 = dma.done [#allocation3], 1024
    $region37: #{tpu_custom_call.1} parent=1 // pred_fallthru
      _
    // Predicated region
    $region38: #{tpu_custom_call.1} parent=1 // pred_check
      _
    $region39: #{tpu_custom_call.1} parent=1 // pred_check_branch
      %77 = sbr.rel (0) target = $region41
    $region40: #{tpu_custom_call.1} parent=1 // pred_region
      %78 = dma.done [#allocation6], 1024
    $region41: #{tpu_custom_call.1} parent=1 // pred_fallthru
      _
    // Predicated region
    $region42: #{tpu_custom_call.1} parent=1 // pred_check
      _
    $region43: #{tpu_custom_call.1} parent=1 // pred_check_branch
      %80 = sbr.rel (0) target = $region45
    $region44: #{tpu_custom_call.1} parent=1 // pred_region
      %81 = dma.done [#allocation6], 1024
    $region45: #{tpu_custom_call.1} parent=1 // pred_fallthru
      _
    // Predicated region
    $region46: #{tpu_custom_call.1} parent=1 // pred_check
      _
    $region47: #{tpu_custom_call.1} parent=1 // pred_check_branch
      %83 = sbr.rel (0) target = $region49
    $region48: #{tpu_custom_call.1} parent=1 // pred_region
      %84 = dma.done [#allocation9], 1024
    $region49: #{tpu_custom_call.1} parent=1 // pred_fallthru
      _
    %v86 = vlaneseq
    %v87 = vand.u32 %v86, 127
    %v88 = vld [vmem:[%s0] sm:$0xff]
    %v89 = vld [vmem:[%s0 + $0x8] sm:$0xff]
    %90 = vset.pattern.permute.xlu0 0
    %91 = vperm.xlu0 %90, %v88
    %v92 = vpop.permute.xlu0 %91
    %93 = vset.pattern.permute.xlu0 0
    %94 = vperm.xlu0 %93, %v89
    %v95 = vpop.permute.xlu0 %94
    %vm96 = vcmp.eq.s32.totalorder %v92, %v87
    %vm97 = vcmp.eq.s32.totalorder %v95, %v87
    %v98 = vsel %vm96, 1, 0
    %v99 = vsel %vm97, 1, 0
    %v100 = vcvt.s32.f32 %v98
    %v101 = vcvt.s32.f32 %v99
    %v102 = vld [vmem:[%s1] sm:$0xff]
    %v103 = vld [vmem:[%s1 + $0x8] sm:$0xff]
    %104 = vset.pattern.permute.xlu0 0
    %105 = vperm.xlu0 %104, %v102
    %v106 = vpop.permute.xlu0 %105
    %107 = vset.pattern.permute.xlu0 0
    %108 = vperm.xlu0 %107, %v103
    %v109 = vpop.permute.xlu0 %108
    %vm110 = vcmp.eq.s32.totalorder %v106, %v87
    %vm111 = vcmp.eq.s32.totalorder %v109, %v87
    %v112 = vsel %vm110, 1, 0
    %v113 = vsel %vm111, 1, 0
    %v114 = vcvt.s32.f32 %v112
    %v115 = vcvt.s32.f32 %v113
    %v116 = vld [vmem:[#allocation2] sm:$0xff]
    %v117 = vld [vmem:[#allocation2 + $0x8] sm:$0xff]
    %v118 = vld [vmem:[#allocation2 + $0x10] sm:$0xff]
    %v119 = vld [vmem:[#allocation2 + $0x18] sm:$0xff]
    %v120 = vld [vmem:[#allocation2 + $0x20] sm:$0xff]
    %v121 = vld [vmem:[#allocation2 + $0x28] sm:$0xff]
    %v122 = vld [vmem:[#allocation2 + $0x30] sm:$0xff]
    %v123 = vld [vmem:[#allocation2 + $0x38] sm:$0xff]
    %vm124 = vcmask 523264
    %v126 = vsel %vm124, %v100, 0
    %v129 = vsel %vm124, %v101, 0
    %131 = vmatprep.subr.mxu0 0.0
    %132 = vmatpush1.msra.mxu0 %v116
    %133 = vmatprep.subr.mxu0 0.0
    %134 = vmatpush1.msra.mxu0 %v117
    %135 = vmatprep.subr.mxu0 0.0
    %136 = vmatpush1.msra.mxu0 %v118
    %137 = vmatprep.subr.mxu0 0.0
    %138 = vmatpush1.msra.mxu0 %v119
    %139 = vmatprep.subr.mxu0 0.0
    %140 = vmatpush1.msra.mxu0 %v120
    %141 = vmatprep.subr.mxu0 0.0
    %142 = vmatpush1.msra.mxu0 %v121
    %143 = vmatprep.subr.mxu0 0.0
    %144 = vmatpush1.msra.mxu0 %v122
    %145 = vmatprep.subr.mxu0 0.0
    %146 = vmatpush1.msra.mxu0 %v123
    %147 = vmatprep.subr.mxu0 0.0
    %148 = vmatpush1.msra.mxu0 0.0
    %149 = vmatprep.subr.mxu0 0.0
    %150 = vmatpush1.msra.mxu0 0.0
    %151 = vmatprep.subr.mxu0 0.0
    %152 = vmatpush1.msra.mxu0 0.0
    %153 = vmatprep.subr.mxu0 0.0
    %154 = vmatpush1.msra.mxu0 0.0
    %155 = vmatprep.subr.mxu0 0.0
    %156 = vmatpush1.msra.mxu0 0.0
    %157 = vmatprep.subr.mxu0 0.0
    %158 = vmatpush1.msra.mxu0 0.0
    %159 = vmatprep.subr.mxu0 0.0
    %160 = vmatpush1.msra.mxu0 0.0
    %161 = vmatprep.subr.mxu0 0.0
    %162 = vmatpush1.msra.mxu0 0.0
    %163 = vmatprep.subr.mxu0 0.0
    %164 = vmatpush1.msra.mxu0 0.0
    %165 = vmatprep.subr.mxu0 0.0
    %166 = vmatpush1.msra.mxu0 0.0
    %167 = vmatprep.subr.mxu0 0.0
    %168 = vmatpush1.msra.mxu0 0.0
    %169 = vmatprep.subr.mxu0 0.0
    %170 = vmatpush1.msra.mxu0 0.0
    %171 = vmatprep.subr.mxu0 0.0
    %172 = vmatpush1.msra.mxu0 0.0
    %173 = vmatprep.subr.mxu0 0.0
    %174 = vmatpush1.msra.mxu0 0.0
    %175 = vmatprep.subr.mxu0 0.0
    %176 = vmatpush1.msra.mxu0 0.0
    %177 = vmatprep.subr.mxu0 0.0
    %178 = vmatpush1.msra.mxu0 0.0
    %179 = vmatprep.subr.mxu0 0.0
    %180 = vmatpush1.msra.mxu0 0.0
    %181 = vmatprep.subr.mxu0 0.0
    %182 = vmatpush1.msra.mxu0 0.0
    %183 = vmatprep.subr.mxu0 0.0
    %184 = vmatpush1.msra.mxu0 0.0
    %185 = vmatprep.subr.mxu0 0.0
    %186 = vmatpush1.msra.mxu0 0.0
    %187 = vmatprep.subr.mxu0 0.0
    %188 = vmatpush1.msra.mxu0 0.0
    %189 = vmatprep.subr.mxu0 0.0
    %190 = vmatpush1.msra.mxu0 0.0
    %191 = vmatprep.subr.mxu0 0.0
    %192 = vmatpush1.msra.mxu0 0.0
    %193 = vmatprep.subr.mxu0 0.0
    %194 = vmatpush1.msra.mxu0 0.0
    %195 = vmatprep.mubr.f32.mxu0 0.0
    %196 = vmatmul.mubr.f32.gmra.mrb[0].mxu0 %v126
    %v197 = vpop.f32.mrb[0].mxu0
    %v198 = vadd.f32 0.0, %v197
    %v199 = vpop.f32.mrb[0].mxu0
    %200 = vmatprep.mubr.f32.mxu0 0.0
    %201 = vmatmul.mubr.f32.gmra.mrb[0].mxu0 %v129
    %v202 = vpop.f32.mrb[0].mxu0
    %v203 = vadd.f32 0.0, %v202
    %v204 = vpop.f32.mrb[0].mxu0
    %205 = vdwg.mxu0
    %v206 = vld [vmem:[#allocation5] sm:$0xff]
    %v207 = vld [vmem:[#allocation5 + $0x8] sm:$0xff]
    %v208 = vld [vmem:[#allocation5 + $0x10] sm:$0xff]
    %v209 = vld [vmem:[#allocation5 + $0x18] sm:$0xff]
    %v210 = vld [vmem:[#allocation5 + $0x20] sm:$0xff]
    %v211 = vld [vmem:[#allocation5 + $0x28] sm:$0xff]
    %v212 = vld [vmem:[#allocation5 + $0x30] sm:$0xff]
    %v213 = vld [vmem:[#allocation5 + $0x38] sm:$0xff]
    %v215 = vsel %vm124, %v114, 0
    %v218 = vsel %vm124, %v115, 0
    %220 = vmatprep.subr.mxu0 0.0
    %221 = vmatpush1.msra.mxu0 %v206
    %222 = vmatprep.subr.mxu0 0.0
    %223 = vmatpush1.msra.mxu0 %v207
    %224 = vmatprep.subr.mxu0 0.0
    %225 = vmatpush1.msra.mxu0 %v208
    %226 = vmatprep.subr.mxu0 0.0
    %227 = vmatpush1.msra.mxu0 %v209
    %228 = vmatprep.subr.mxu0 0.0
    %229 = vmatpush1.msra.mxu0 %v210
    %230 = vmatprep.subr.mxu0 0.0
    %231 = vmatpush1.msra.mxu0 %v211
    %232 = vmatprep.subr.mxu0 0.0
    %233 = vmatpush1.msra.mxu0 %v212
    %234 = vmatprep.subr.mxu0 0.0
    %235 = vmatpush1.msra.mxu0 %v213
    %236 = vmatprep.subr.mxu0 0.0
    %237 = vmatpush1.msra.mxu0 0.0
    %238 = vmatprep.subr.mxu0 0.0
    %239 = vmatpush1.msra.mxu0 0.0
    %240 = vmatprep.subr.mxu0 0.0
    %241 = vmatpush1.msra.mxu0 0.0
    %242 = vmatprep.subr.mxu0 0.0
    %243 = vmatpush1.msra.mxu0 0.0
    %244 = vmatprep.subr.mxu0 0.0
    %245 = vmatpush1.msra.mxu0 0.0
    %246 = vmatprep.subr.mxu0 0.0
    %247 = vmatpush1.msra.mxu0 0.0
    %248 = vmatprep.subr.mxu0 0.0
    %249 = vmatpush1.msra.mxu0 0.0
    %250 = vmatprep.subr.mxu0 0.0
    %251 = vmatpush1.msra.mxu0 0.0
    %252 = vmatprep.subr.mxu0 0.0
    %253 = vmatpush1.msra.mxu0 0.0
    %254 = vmatprep.subr.mxu0 0.0
    %255 = vmatpush1.msra.mxu0 0.0
    %256 = vmatprep.subr.mxu0 0.0
    %257 = vmatpush1.msra.mxu0 0.0
    %258 = vmatprep.subr.mxu0 0.0
    %259 = vmatpush1.msra.mxu0 0.0
    %260 = vmatprep.subr.mxu0 0.0
    %261 = vmatpush1.msra.mxu0 0.0
    %262 = vmatprep.subr.mxu0 0.0
    %263 = vmatpush1.msra.mxu0 0.0
    %264 = vmatprep.subr.mxu0 0.0
    %265 = vmatpush1.msra.mxu0 0.0
    %266 = vmatprep.subr.mxu0 0.0
    %267 = vmatpush1.msra.mxu0 0.0
    %268 = vmatprep.subr.mxu0 0.0
    %269 = vmatpush1.msra.mxu0 0.0
    %270 = vmatprep.subr.mxu0 0.0
    %271 = vmatpush1.msra.mxu0 0.0
    %272 = vmatprep.subr.mxu0 0.0
    %273 = vmatpush1.msra.mxu0 0.0
    %274 = vmatprep.subr.mxu0 0.0
    %275 = vmatpush1.msra.mxu0 0.0
    %276 = vmatprep.subr.mxu0 0.0
    %277 = vmatpush1.msra.mxu0 0.0
    %278 = vmatprep.subr.mxu0 0.0
    %279 = vmatpush1.msra.mxu0 0.0
    %280 = vmatprep.subr.mxu0 0.0
    %281 = vmatpush1.msra.mxu0 0.0
    %282 = vmatprep.subr.mxu0 0.0
    %283 = vmatpush1.msra.mxu0 0.0
    %284 = vmatprep.mubr.f32.mxu0 0.0
    %285 = vmatmul.mubr.f32.gmra.mrb[0].mxu0 %v215
    %v286 = vpop.f32.mrb[0].mxu0
    %v287 = vadd.f32 0.0, %v286
    %v288 = vpop.f32.mrb[0].mxu0
    %289 = vmatprep.mubr.f32.mxu0 0.0
    %290 = vmatmul.mubr.f32.gmra.mrb[0].mxu0 %v218
    %v291 = vpop.f32.mrb[0].mxu0
    %v292 = vadd.f32 0.0, %v291
    %v293 = vpop.f32.mrb[0].mxu0
    %294 = vdwg.mxu0
    %v295 = vpack.c.bf16 %v203, %v198
    %v296 = vld [vmem:[#allocation7] sm:$0xf]
    %v297 = vld [vmem:[#allocation7 + $0x4] sm:$0xf]
    %v298 = vld [vmem:[#allocation7 + $0x8] sm:$0xf]
    %v299 = vld [vmem:[#allocation7 + $0xc] sm:$0xf]
    %v300 = vld [vmem:[#allocation7 + $0x10] sm:$0xf]
    %v301 = vld [vmem:[#allocation7 + $0x14] sm:$0xf]
    %v302 = vld [vmem:[#allocation7 + $0x18] sm:$0xf]
    %v303 = vld [vmem:[#allocation7 + $0x1c] sm:$0xf]
    %v304 = vld [vmem:[#allocation7 + $0x20] sm:$0xf]
    %v305 = vld [vmem:[#allocation7 + $0x24] sm:$0xf]
    %v306 = vld [vmem:[#allocation7 + $0x28] sm:$0xf]
    %v307 = vld [vmem:[#allocation7 + $0x2c] sm:$0xf]
    %v308 = vld [vmem:[#allocation7 + $0x30] sm:$0xf]
    %v309 = vld [vmem:[#allocation7 + $0x34] sm:$0xf]
    %v310 = vld [vmem:[#allocation7 + $0x38] sm:$0xf]
    %v311 = vld [vmem:[#allocation7 + $0x3c] sm:$0xf]
    %v312 = vld [vmem:[%s5] sm:$0x1]
    %v314 = vlaneseq
    %v315 = vshrl.u32 %v314, 7
    %v316 = vsub.s32 0, %v315
    %v317 = vrot.slane %v312, %v316
    %v335 = vunpack.c.l.b16 %v296
    %v336 = vunpack.c.l.b16 %v297
    %v337 = vunpack.c.l.b16 %v298
    %v338 = vunpack.c.l.b16 %v299
    %v339 = vunpack.c.l.b16 %v300
    %v340 = vunpack.c.l.b16 %v301
    %v341 = vunpack.c.l.b16 %v302
    %v342 = vunpack.c.l.b16 %v303
    %v343 = vunpack.c.l.b16 %v304
    %v344 = vunpack.c.l.b16 %v305
    %v345 = vunpack.c.l.b16 %v306
    %v346 = vunpack.c.l.b16 %v307
    %v347 = vunpack.c.l.b16 %v308
    %v348 = vunpack.c.l.b16 %v309
    %v349 = vunpack.c.l.b16 %v310
    %v350 = vunpack.c.l.b16 %v311
    %v351 = vpack.c.b16 %v336, %v335
    %v352 = vpack.c.b16 %v338, %v337
    %v353 = vpack.c.b16 %v340, %v339
    %v354 = vpack.c.b16 %v342, %v341
    %v355 = vpack.c.b16 %v344, %v343
    %v356 = vpack.c.b16 %v346, %v345
    %v357 = vpack.c.b16 %v348, %v347
    %v358 = vpack.c.b16 %v350, %v349
    %367 = vmatprep.subr.bf16.mxu0 0
    %368 = vmatpush1.bf16.msra.mxu0 %v351
    %369 = vmatprep.subr.bf16.mxu0 0
    %370 = vmatpush1.bf16.msra.mxu0 %v352
    %371 = vmatprep.subr.bf16.mxu0 0
    %372 = vmatpush1.bf16.msra.mxu0 %v353
    %373 = vmatprep.subr.bf16.mxu0 0
    %374 = vmatpush1.bf16.msra.mxu0 %v354
    %375 = vmatprep.subr.bf16.mxu0 0
    %376 = vmatpush1.bf16.msra.mxu0 %v355
    %377 = vmatprep.subr.bf16.mxu0 0
    %378 = vmatpush1.bf16.msra.mxu0 %v356
    %379 = vmatprep.subr.bf16.mxu0 0
    %380 = vmatpush1.bf16.msra.mxu0 %v357
    %381 = vmatprep.subr.bf16.mxu0 0
    %382 = vmatpush1.bf16.msra.mxu0 %v358
    %383 = vmatprep.subr.bf16.mxu0 0
    %384 = vmatpush1.bf16.msra.mxu0 0
    %385 = vmatprep.subr.bf16.mxu0 0
    %386 = vmatpush1.bf16.msra.mxu0 0
    %387 = vmatprep.subr.bf16.mxu0 0
    %388 = vmatpush1.bf16.msra.mxu0 0
    %389 = vmatprep.subr.bf16.mxu0 0
    %390 = vmatpush1.bf16.msra.mxu0 0
    %391 = vmatprep.subr.bf16.mxu0 0
    %392 = vmatpush1.bf16.msra.mxu0 0
    %393 = vmatprep.subr.bf16.mxu0 0
    %394 = vmatpush1.bf16.msra.mxu0 0
    %395 = vmatprep.subr.bf16.mxu0 0
    %396 = vmatpush1.bf16.msra.mxu0 0
    %397 = vmatprep.subr.bf16.mxu0 0
    %398 = vmatpush1.bf16.msra.mxu0 0
    %399 = vmatprep.mubr.bf16.mxu0 0
    %400 = vmatmul.mubr.bf16.gmra.mrb[0].mxu0 %v295
    %v401 = vpop.f32.mrb[0].mxu0
    %v402 = vadd.f32 %v317, %v401
    %v403 = vpop.f32.mrb[0].mxu0
    %v404 = vpop.f32.mrb[0].mxu0
    %v405 = vadd.f32 %v317, %v404
    %v406 = vpop.f32.mrb[0].mxu0
    %407 = vdwg.mxu0
    %v408 = vtanh.pop %v402
    %v409 = vtanh.pop %v405
    %v410 = vpack.c.bf16 %v292, %v287
    %v411 = vld [vmem:[#allocation8] sm:$0xf]
    %v412 = vld [vmem:[#allocation8 + $0x4] sm:$0xf]
    %v413 = vld [vmem:[#allocation8 + $0x8] sm:$0xf]
    %v414 = vld [vmem:[#allocation8 + $0xc] sm:$0xf]
    %v415 = vld [vmem:[#allocation8 + $0x10] sm:$0xf]
    %v416 = vld [vmem:[#allocation8 + $0x14] sm:$0xf]
    %v417 = vld [vmem:[#allocation8 + $0x18] sm:$0xf]
    %v418 = vld [vmem:[#allocation8 + $0x1c] sm:$0xf]
    %v419 = vld [vmem:[#allocation8 + $0x20] sm:$0xf]
    %v420 = vld [vmem:[#allocation8 + $0x24] sm:$0xf]
    %v421 = vld [vmem:[#allocation8 + $0x28] sm:$0xf]
    %v422 = vld [vmem:[#allocation8 + $0x2c] sm:$0xf]
    %v423 = vld [vmem:[#allocation8 + $0x30] sm:$0xf]
    %v424 = vld [vmem:[#allocation8 + $0x34] sm:$0xf]
    %v425 = vld [vmem:[#allocation8 + $0x38] sm:$0xf]
    %v426 = vld [vmem:[#allocation8 + $0x3c] sm:$0xf]
    %v427 = vld [vmem:[%s7] sm:$0x1]
    %v429 = vlaneseq
    %v430 = vshrl.u32 %v429, 7
    %v431 = vsub.s32 0, %v430
    %v432 = vrot.slane %v427, %v431
    %v450 = vunpack.c.l.b16 %v411
    %v451 = vunpack.c.l.b16 %v412
    %v452 = vunpack.c.l.b16 %v413
    %v453 = vunpack.c.l.b16 %v414
    %v454 = vunpack.c.l.b16 %v415
    %v455 = vunpack.c.l.b16 %v416
    %v456 = vunpack.c.l.b16 %v417
    %v457 = vunpack.c.l.b16 %v418
    %v458 = vunpack.c.l.b16 %v419
    %v459 = vunpack.c.l.b16 %v420
    %v460 = vunpack.c.l.b16 %v421
    %v461 = vunpack.c.l.b16 %v422
    %v462 = vunpack.c.l.b16 %v423
    %v463 = vunpack.c.l.b16 %v424
    %v464 = vunpack.c.l.b16 %v425
    %v465 = vunpack.c.l.b16 %v426
    %v466 = vpack.c.b16 %v451, %v450
    %v467 = vpack.c.b16 %v453, %v452
    %v468 = vpack.c.b16 %v455, %v454
    %v469 = vpack.c.b16 %v457, %v456
    %v470 = vpack.c.b16 %v459, %v458
    %v471 = vpack.c.b16 %v461, %v460
    %v472 = vpack.c.b16 %v463, %v462
    %v473 = vpack.c.b16 %v465, %v464
    %482 = vmatprep.subr.bf16.mxu0 0
    %483 = vmatpush1.bf16.msra.mxu0 %v466
    %484 = vmatprep.subr.bf16.mxu0 0
    %485 = vmatpush1.bf16.msra.mxu0 %v467
    %486 = vmatprep.subr.bf16.mxu0 0
    %487 = vmatpush1.bf16.msra.mxu0 %v468
    %488 = vmatprep.subr.bf16.mxu0 0
    %489 = vmatpush1.bf16.msra.mxu0 %v469
    %490 = vmatprep.subr.bf16.mxu0 0
    %491 = vmatpush1.bf16.msra.mxu0 %v470
    %492 = vmatprep.subr.bf16.mxu0 0
    %493 = vmatpush1.bf16.msra.mxu0 %v471
    %494 = vmatprep.subr.bf16.mxu0 0
    %495 = vmatpush1.bf16.msra.mxu0 %v472
    %496 = vmatprep.subr.bf16.mxu0 0
    %497 = vmatpush1.bf16.msra.mxu0 %v473
    %498 = vmatprep.subr.bf16.mxu0 0
    %499 = vmatpush1.bf16.msra.mxu0 0
    %500 = vmatprep.subr.bf16.mxu0 0
    %501 = vmatpush1.bf16.msra.mxu0 0
    %502 = vmatprep.subr.bf16.mxu0 0
    %503 = vmatpush1.bf16.msra.mxu0 0
    %504 = vmatprep.subr.bf16.mxu0 0
    %505 = vmatpush1.bf16.msra.mxu0 0
    %506 = vmatprep.subr.bf16.mxu0 0
    %507 = vmatpush1.bf16.msra.mxu0 0
    %508 = vmatprep.subr.bf16.mxu0 0
    %509 = vmatpush1.bf16.msra.mxu0 0
    %510 = vmatprep.subr.bf16.mxu0 0
    %511 = vmatpush1.bf16.msra.mxu0 0
    %512 = vmatprep.subr.bf16.mxu0 0
    %513 = vmatpush1.bf16.msra.mxu0 0
    %514 = vmatprep.mubr.bf16.mxu0 0
    %515 = vmatmul.mubr.bf16.gmra.mrb[0].mxu0 %v410
    %v516 = vpop.f32.mrb[0].mxu0
    %v517 = vadd.f32 %v432, %v516
    %v518 = vpop.f32.mrb[0].mxu0
    %v519 = vpop.f32.mrb[0].mxu0
    %v520 = vadd.f32 %v432, %v519
    %v521 = vpop.f32.mrb[0].mxu0
    %522 = vdwg.mxu0
    %v523 = vtanh.pop %v517
    %v524 = vtanh.pop %v520
    %v525 = vmul.f32 %v408, %v523
    %v526 = vmul.f32 %v409, %v524
    %527 = vmatprep.subr.mxu0 0.0
    %528 = vmatpush1.xpose.msra.mxu0 %v526
    %529 = vmatprep.subr.mxu0 0.0
    %530 = vmatpush1.xpose.msra.mxu0 0.0
    %531 = vmatprep.subr.mxu0 0.0
    %532 = vmatpush1.xpose.msra.mxu0 0.0
    %533 = vmatprep.subr.mxu0 0.0
    %534 = vmatpush1.xpose.msra.mxu0 0.0
    %535 = vmatprep.subr.mxu0 0.0
    %536 = vmatpush1.xpose.msra.mxu0 0.0
    %537 = vmatprep.subr.mxu0 0.0
    %538 = vmatpush1.xpose.msra.mxu0 0.0
    %539 = vmatprep.subr.mxu0 0.0
    %540 = vmatpush1.xpose.msra.mxu0 0.0
    %541 = vmatprep.subr.mxu0 0.0
    %542 = vmatpush1.xpose.msra.mxu0 0.0
    %543 = vmatprep.subr.mxu0 0.0
    %544 = vmatpush1.xpose.msra.mxu0 0.0
    %545 = vmatprep.subr.mxu0 0.0
    %546 = vmatpush1.xpose.msra.mxu0 0.0
    %547 = vmatprep.subr.mxu0 0.0
    %548 = vmatpush1.xpose.msra.mxu0 0.0
    %549 = vmatprep.subr.mxu0 0.0
    %550 = vmatpush1.xpose.msra.mxu0 0.0
    %551 = vmatprep.subr.mxu0 0.0
    %552 = vmatpush1.xpose.msra.mxu0 0.0
    %553 = vmatprep.subr.mxu0 0.0
    %554 = vmatpush1.xpose.msra.mxu0 0.0
    %555 = vmatprep.subr.mxu0 0.0
    %556 = vmatpush1.xpose.msra.mxu0 0.0
    %557 = vmatprep.subr.mxu0 0.0
    %558 = vmatpush1.xpose.msra.mxu0 0.0
    %559 = vmatprep.subr.mxu0 0.0
    %560 = vmatpush1.xpose.msra.mxu0 0.0
    %561 = vmatprep.subr.mxu0 0.0
    %562 = vmatpush1.xpose.msra.mxu0 0.0
    %563 = vmatprep.subr.mxu0 0.0
    %564 = vmatpush1.xpose.msra.mxu0 0.0
    %565 = vmatprep.subr.mxu0 0.0
    %566 = vmatpush1.xpose.msra.mxu0 0.0
    %567 = vmatprep.subr.mxu0 0.0
    %568 = vmatpush1.xpose.msra.mxu0 0.0
    %569 = vmatprep.subr.mxu0 0.0
    %570 = vmatpush1.xpose.msra.mxu0 0.0
    %571 = vmatprep.subr.mxu0 0.0
    %572 = vmatpush1.xpose.msra.mxu0 0.0
    %573 = vmatprep.subr.mxu0 0.0
    %574 = vmatpush1.xpose.msra.mxu0 0.0
    %575 = vmatprep.subr.mxu0 0.0
    %576 = vmatpush1.xpose.msra.mxu0 0.0
    %577 = vmatprep.subr.mxu0 0.0
    %578 = vmatpush1.xpose.msra.mxu0 0.0
    %579 = vmatprep.subr.mxu0 0.0
    %580 = vmatpush1.xpose.msra.mxu0 0.0
    %581 = vmatprep.subr.mxu0 0.0
    %582 = vmatpush1.xpose.msra.mxu0 0.0
    %583 = vmatprep.subr.mxu0 0.0
    %584 = vmatpush1.xpose.msra.mxu0 0.0
    %585 = vmatprep.subr.mxu0 0.0
    %586 = vmatpush1.xpose.msra.mxu0 0.0
    %587 = vmatprep.subr.mxu0 0.0
    %588 = vmatpush1.xpose.msra.mxu0 0.0
    %589 = vmatprep.subr.mxu0 0.0
    %590 = vmatpush1.xpose.msra.mxu0 0.0
    %591 = vmatprep.mubr.f32.mxu0 0.0
    %592 = vmatmul.mubr.f32.gmra.mrb[0].mxu0 %v525
    %v593 = vpop.f32.mrb[0].mxu0
    %v594 = vadd.f32 0.0, %v593
    %v595 = vpop.f32.mrb[0].mxu0
    %596 = vdwg.mxu0
    %597 = vmatprep.subr.mxu0 0.0
    %598 = vmatpush1.xpose.msra.mxu0 %v523
    %599 = vmatprep.subr.mxu0 0.0
    %600 = vmatpush1.xpose.msra.mxu0 0.0
    %601 = vmatprep.subr.mxu0 0.0
    %602 = vmatpush1.xpose.msra.mxu0 0.0
    %603 = vmatprep.subr.mxu0 0.0
    %604 = vmatpush1.xpose.msra.mxu0 0.0
    %605 = vmatprep.subr.mxu0 0.0
    %606 = vmatpush1.xpose.msra.mxu0 0.0
    %607 = vmatprep.subr.mxu0 0.0
    %608 = vmatpush1.xpose.msra.mxu0 0.0
    %609 = vmatprep.subr.mxu0 0.0
    %610 = vmatpush1.xpose.msra.mxu0 0.0
    %611 = vmatprep.subr.mxu0 0.0
    %612 = vmatpush1.xpose.msra.mxu0 0.0
    %613 = vmatprep.subr.mxu0 0.0
    %614 = vmatpush1.xpose.msra.mxu0 0.0
    %615 = vmatprep.subr.mxu0 0.0
    %616 = vmatpush1.xpose.msra.mxu0 0.0
    %617 = vmatprep.subr.mxu0 0.0
    %618 = vmatpush1.xpose.msra.mxu0 0.0
    %619 = vmatprep.subr.mxu0 0.0
    %620 = vmatpush1.xpose.msra.mxu0 0.0
    %621 = vmatprep.subr.mxu0 0.0
    %622 = vmatpush1.xpose.msra.mxu0 0.0
    %623 = vmatprep.subr.mxu0 0.0
    %624 = vmatpush1.xpose.msra.mxu0 0.0
    %625 = vmatprep.subr.mxu0 0.0
    %626 = vmatpush1.xpose.msra.mxu0 0.0
    %627 = vmatprep.subr.mxu0 0.0
    %628 = vmatpush1.xpose.msra.mxu0 0.0
    %629 = vmatprep.subr.mxu0 0.0
    %630 = vmatpush1.xpose.msra.mxu0 0.0
    %631 = vmatprep.subr.mxu0 0.0
    %632 = vmatpush1.xpose.msra.mxu0 0.0
    %633 = vmatprep.subr.mxu0 0.0
    %634 = vmatpush1.xpose.msra.mxu0 0.0
    %635 = vmatprep.subr.mxu0 0.0
    %636 = vmatpush1.xpose.msra.mxu0 0.0
    %637 = vmatprep.subr.mxu0 0.0
    %638 = vmatpush1.xpose.msra.mxu0 0.0
    %639 = vmatprep.subr.mxu0 0.0
    %640 = vmatpush1.xpose.msra.mxu0 0.0
    %641 = vmatprep.subr.mxu0 0.0
    %642 = vmatpush1.xpose.msra.mxu0 0.0
    %643 = vmatprep.subr.mxu0 0.0
    %644 = vmatpush1.xpose.msra.mxu0 0.0
    %645 = vmatprep.subr.mxu0 0.0
    %646 = vmatpush1.xpose.msra.mxu0 0.0
    %647 = vmatprep.subr.mxu0 0.0
    %648 = vmatpush1.xpose.msra.mxu0 0.0
    %649 = vmatprep.subr.mxu0 0.0
    %650 = vmatpush1.xpose.msra.mxu0 0.0
    %651 = vmatprep.subr.mxu0 0.0
    %652 = vmatpush1.xpose.msra.mxu0 0.0
    %653 = vmatprep.subr.mxu0 0.0
    %654 = vmatpush1.xpose.msra.mxu0 0.0
    %655 = vmatprep.subr.mxu0 0.0
    %656 = vmatpush1.xpose.msra.mxu0 0.0
    %657 = vmatprep.subr.mxu0 0.0
    %658 = vmatpush1.xpose.msra.mxu0 0.0
    %659 = vmatprep.subr.mxu0 0.0
    %660 = vmatpush1.xpose.msra.mxu0 0.0
    %661 = vmatprep.mubr.f32.mxu0 0.0
    %662 = vmatmul.mubr.f32.gmra.mrb[0].mxu0 %v408
    %v663 = vpop.f32.mrb[0].mxu0
    %v664 = vadd.f32 0.0, %v663
    %v665 = vpop.f32.mrb[0].mxu0
    %666 = vdwg.mxu0
    %667 = vmatprep.subr.mxu0 0.0
    %668 = vmatpush1.xpose.msra.mxu0 %v524
    %669 = vmatprep.subr.mxu0 0.0
    %670 = vmatpush1.xpose.msra.mxu0 0.0
    %671 = vmatprep.subr.mxu0 0.0
    %672 = vmatpush1.xpose.msra.mxu0 0.0
    %673 = vmatprep.subr.mxu0 0.0
    %674 = vmatpush1.xpose.msra.mxu0 0.0
    %675 = vmatprep.subr.mxu0 0.0
    %676 = vmatpush1.xpose.msra.mxu0 0.0
    %677 = vmatprep.subr.mxu0 0.0
    %678 = vmatpush1.xpose.msra.mxu0 0.0
    %679 = vmatprep.subr.mxu0 0.0
    %680 = vmatpush1.xpose.msra.mxu0 0.0
    %681 = vmatprep.subr.mxu0 0.0
    %682 = vmatpush1.xpose.msra.mxu0 0.0
    %683 = vmatprep.subr.mxu0 0.0
    %684 = vmatpush1.xpose.msra.mxu0 0.0
    %685 = vmatprep.subr.mxu0 0.0
    %686 = vmatpush1.xpose.msra.mxu0 0.0
    %687 = vmatprep.subr.mxu0 0.0
    %688 = vmatpush1.xpose.msra.mxu0 0.0
    %689 = vmatprep.subr.mxu0 0.0
    %690 = vmatpush1.xpose.msra.mxu0 0.0
    %691 = vmatprep.subr.mxu0 0.0
    %692 = vmatpush1.xpose.msra.mxu0 0.0
    %693 = vmatprep.subr.mxu0 0.0
    %694 = vmatpush1.xpose.msra.mxu0 0.0
    %695 = vmatprep.subr.mxu0 0.0
    %696 = vmatpush1.xpose.msra.mxu0 0.0
    %697 = vmatprep.subr.mxu0 0.0
    %698 = vmatpush1.xpose.msra.mxu0 0.0
    %699 = vmatprep.subr.mxu0 0.0
    %700 = vmatpush1.xpose.msra.mxu0 0.0
    %701 = vmatprep.subr.mxu0 0.0
    %702 = vmatpush1.xpose.msra.mxu0 0.0
    %703 = vmatprep.subr.mxu0 0.0
    %704 = vmatpush1.xpose.msra.mxu0 0.0
    %705 = vmatprep.subr.mxu0 0.0
    %706 = vmatpush1.xpose.msra.mxu0 0.0
    %707 = vmatprep.subr.mxu0 0.0
    %708 = vmatpush1.xpose.msra.mxu0 0.0
    %709 = vmatprep.subr.mxu0 0.0
    %710 = vmatpush1.xpose.msra.mxu0 0.0
    %711 = vmatprep.subr.mxu0 0.0
    %712 = vmatpush1.xpose.msra.mxu0 0.0
    %713 = vmatprep.subr.mxu0 0.0
    %714 = vmatpush1.xpose.msra.mxu0 0.0
    %715 = vmatprep.subr.mxu0 0.0
    %716 = vmatpush1.xpose.msra.mxu0 0.0
    %717 = vmatprep.subr.mxu0 0.0
    %718 = vmatpush1.xpose.msra.mxu0 0.0
    %719 = vmatprep.subr.mxu0 0.0
    %720 = vmatpush1.xpose.msra.mxu0 0.0
    %721 = vmatprep.subr.mxu0 0.0
    %722 = vmatpush1.xpose.msra.mxu0 0.0
    %723 = vmatprep.subr.mxu0 0.0
    %724 = vmatpush1.xpose.msra.mxu0 0.0
    %725 = vmatprep.subr.mxu0 0.0
    %726 = vmatpush1.xpose.msra.mxu0 0.0
    %727 = vmatprep.subr.mxu0 0.0
    %728 = vmatpush1.xpose.msra.mxu0 0.0
    %729 = vmatprep.subr.mxu0 0.0
    %730 = vmatpush1.xpose.msra.mxu0 0.0
    %731 = vmatprep.mubr.f32.mxu0 0.0
    %732 = vmatmul.mubr.f32.gmra.mrb[0].mxu0 %v409
    %v733 = vpop.f32.mrb[0].mxu0
    %v734 = vadd.f32 0.0, %v733
    %v735 = vpop.f32.mrb[0].mxu0
    %736 = vdwg.mxu0
    %v737 = vmul.f32 %v525, %v526
    %vm738 = vcmask 1043456
    %v739 = vsel %vm738, %v737, 0.0
    %740 = vadd.xlane.f32.xlu0 %v739
    %v741 = vpop.xlane.xlu0 %740
    %v742 = vsel %vm738, %v525, 0.0
    %743 = vadd.xlane.f32.xlu0 %v742
    %v744 = vpop.xlane.xlu0 %743
    %v745 = vsel %vm738, %v526, 0.0
    %746 = vadd.xlane.f32.xlu0 %v745
    %v747 = vpop.xlane.xlu0 %746
    %vm748 = vcmask 60416
    %v749 = vsel %vm748, %v594, -inf
    %750 = vmax.xlane.f32.xlu0 %v749
    %v751 = vpop.xlane.xlu0 %750
    %v752 = vsub.f32 %v594, %v751
    %v753 = vmul.f32 %v752, 1.442695
    %v754 = vpow.pop %v753
    %v755 = vsel %vm748, %v754, 0.0
    %756 = vadd.xlane.f32.xlu0 %v755
    %v757 = vpop.xlane.xlu0 %756
    %v758 = vlog2.pop %v757
    %v759 = vmul.f32 %v758, 0.6931472
    %v760 = vadd.f32 %v751, %v759
    %v761 = vsel %vm748, %v664, -inf
    %762 = vmax.xlane.f32.xlu0 %v761
    %v763 = vpop.xlane.xlu0 %762
    %v764 = vsub.f32 %v664, %v763
    %v765 = vmul.f32 %v764, 1.442695
    %v766 = vpow.pop %v765
    %v767 = vsel %vm748, %v766, 0.0
    %768 = vadd.xlane.f32.xlu0 %v767
    %v769 = vpop.xlane.xlu0 %768
    %v770 = vlog2.pop %v769
    %v771 = vmul.f32 %v770, 0.6931472
    %v772 = vadd.f32 %v763, %v771
    %v773 = vsel %vm748, %v734, -inf
    %774 = vmax.xlane.f32.xlu0 %v773
    %v775 = vpop.xlane.xlu0 %774
    %v776 = vsub.f32 %v734, %v775
    %v777 = vmul.f32 %v776, 1.442695
    %v778 = vpow.pop %v777
    %v779 = vsel %vm748, %v778, 0.0
    %780 = vadd.xlane.f32.xlu0 %v779
    %v781 = vpop.xlane.xlu0 %780
    %v782 = vlog2.pop %v781
    %v783 = vmul.f32 %v782, 0.6931472
    %v784 = vadd.f32 %v775, %v783
    %v785 = vsub.f32 %v760, %v741
    %vm786 = vcmask 3072
    %v787 = vsel %vm786, %v785, 0.0
    %788 = vadd.xlane.f32.xlu0 %v787
    %v789 = vpop.xlane.xlu0 %788
    %v790 = vrot.slane %v789, 4
    %v791 = vadd.f32 %v789, %v790
    %v792 = vrot.slane %v791, 2
    %v793 = vadd.f32 %v791, %v792
    %v794 = vrot.slane %v793, 1
    %v795 = vadd.f32 %v793, %v794
    %s796 = vtos %v795
    %v797 = vrcp.pop 4.0
    %s798 = vtos %v797
    %s799 = smul.f32 %s796, %s798
    %v800 = vsub.f32 %v772, %v744
    %v801 = vsel %vm786, %v800, 0.0
    %802 = vadd.xlane.f32.xlu0 %v801
    %v803 = vpop.xlane.xlu0 %802
    %v804 = vrot.slane %v803, 4
    %v805 = vadd.f32 %v803, %v804
    %v806 = vrot.slane %v805, 2
    %v807 = vadd.f32 %v805, %v806
    %v808 = vrot.slane %v807, 1
    %v809 = vadd.f32 %v807, %v808
    %s810 = vtos %v809
    %v811 = vrcp.pop 4.0
    %s812 = vtos %v811
    %s813 = smul.f32 %s810, %s812
    %v814 = vsub.f32 %v784, %v747
    %v815 = vsel %vm786, %v814, 0.0
    %816 = vadd.xlane.f32.xlu0 %v815
    %v817 = vpop.xlane.xlu0 %816
    %v818 = vrot.slane %v817, 4
    %v819 = vadd.f32 %v817, %v818
    %v820 = vrot.slane %v819, 2
    %v821 = vadd.f32 %v819, %v820
    %v822 = vrot.slane %v821, 1
    %v823 = vadd.f32 %v821, %v822
    %s824 = vtos %v823
    %v825 = vrcp.pop 4.0
    %s826 = vtos %v825
    %s827 = smul.f32 %s824, %s826
    %v828 = vsub.f32 %v664, %v772
    %v829 = vsub.f32 %v734, %v784
    %v830 = vmul.f32 %v828, 1.442695
    %v831 = vpow.pop %v830
    %v832 = vsub.f32 %v828, %v829
    %v833 = vmul.f32 %v831, %v832
    %v834 = vsel %vm748, %v833, 0.0
    %835 = vadd.xlane.f32.xlu0 %v834
    %v836 = vpop.xlane.xlu0 %835
    %v837 = vrot.slane %v836, 4
    %v838 = vadd.f32 %v836, %v837
    %v839 = vrot.slane %v838, 2
    %v840 = vadd.f32 %v838, %v839
    %v841 = vrot.slane %v840, 1
    %v842 = vadd.f32 %v840, %v841
    %s843 = vtos %v842
    %v844 = vrcp.pop 4.0
    %s845 = vtos %v844
    %s846 = smul.f32 %s843, %s845
    %s847 = sadd.f32 %s813, %s827
    %s848 = sadd.f32 %s799, %s846
    %s849 = sadd.f32 %s847, %s848
    %v850 = vstv %s849
    %851 = vst [vmem:[#allocation10] sm:$0x1] %v850
    %852 = vst [vmem:[#allocation10 + $0x1] sm:$0xf] %v744
    %853 = vst [vmem:[#allocation10 + $0x5] sm:$0x7] 0.0
    // Predicated region
    $region50: #{tpu_custom_call.1} parent=1 // pred_check
      _
    $region51: #{tpu_custom_call.1} parent=1 // pred_check_branch
      %855 = sbr.rel (0) target = $region53
    $region52: #{tpu_custom_call.1} parent=1 // pred_region
      %s857 = ssub.s32 128, 128
      %858 = vsyncadd [#allocation4], %s857
      %s860 = sshll.u32 [#allocation10], 4
      %s861 = int_to_ptr.vmem [resolvable:$true] %s860
      %863 = dma.vmem_to_hbm [thread:$0]  %s861, 128, %s8, [#allocation4]
    $region53: #{tpu_custom_call.1} parent=1 // pred_fallthru
      _
    // Predicated region
    $region54: #{tpu_custom_call.1} parent=1 // pred_check
      _
    $region55: #{tpu_custom_call.1} parent=1 // pred_check_branch
      %865 = sbr.rel (0) target = $region57
    $region56: #{tpu_custom_call.1} parent=1 // pred_region
      %866 = dma.done [#allocation4], 128
    $region57: #{tpu_custom_call.1} parent=1 // pred_fallthru
      _
    %867 = vsyncpa [#allocation3], 1
    %868 = vsyncpa [#allocation6], 1
    %869 = vsyncpa [#allocation9], 1
    %870 = vsyncpa [#allocation4], 1

</llo_original>
